<compile_context>
chip_gen: v6e
topology: v6e:2x2x1
jax: 0.10.0
libtpu: 0.0.40
codegen_flags: <defaults>
</compile_context>

<pallas_src>
import functools

import jax
import jax.numpy as jnp
from jax.experimental import pallas as pl
from jax.experimental.pallas import tpu as pltpu

LANE = 128          # lane (last-dim) width of a vreg
BATCH_ALIGN = 16    # bf16 sublane packing -> keep batch tiles multiples of 16


def _round_up(n, m):
    return ((n + m - 1) // m) * m


def _vmem_capacity_bytes():
    """Physical VMEM of the current chip; conservative 64 MiB fallback (v7x)."""
    try:
        info = pltpu.get_tpu_info()
        cap = getattr(info, "vmem_capacity_bytes", None)
        if cap:
            return int(cap)
    except Exception:
        pass
    return 64 * 2**20


# ---------------------------------------------------------------------------
# Fused kernel: n_layer x (matmul + bias [+ ReLU]) [+ masked log_softmax]
# ---------------------------------------------------------------------------
def _fused_mlp_kernel(x_ref, *refs, n_layer, out_valid, apply_logsoftmax):
    """refs = (w0, b0, w1, b1, ..., w_{L-1}, b_{L-1}, o_ref).

    x arrives bf16; weights arrive pre-cast bf16 (MXU operands); biases f32.
    The activation accumulator is f32 across layers, cast to bf16 only at
    MXU inputs and to the output dtype once at the end.
    """
    o_ref = refs[-1]
    wb = refs[:-1]

    h = x_ref[...]                            # bf16 batch tile (no cast)
    for layer in range(n_layer):              # unrolled: full LLO visibility
        w = wb[2 * layer][...]                # bf16, (d_in_pad, d_out_pad)
        b = wb[2 * layer + 1][...]            # f32,  (1, d_out_pad) -> bcast
        a = h if h.dtype == jnp.bfloat16 else h.astype(jnp.bfloat16)
        y = jnp.dot(a, w, preferred_element_type=jnp.float32) + b
        if layer < n_layer - 1:
            h = jnp.maximum(y, 0.0)           # ReLU in f32 on the VPU
        else:
            h = y

    if apply_logsoftmax:
        # Mask padded lanes (>= out_valid) out of the softmax reduction.
        lane = jax.lax.broadcasted_iota(jnp.int32, h.shape, dimension=1)
        valid = lane < out_valid
        z = jnp.where(valid, h, -1e30)
        m = jnp.max(z, axis=-1, keepdims=True)            # XLU
        s = z - m
        e = jnp.where(valid, jnp.exp(s), 0.0)             # EUP
        lse = jnp.log(jnp.sum(e, axis=-1, keepdims=True))
        h = s - lse

    o_ref[...] = h.astype(o_ref.dtype)        # single final cast, lane-dense


# ---------------------------------------------------------------------------
# One-time parameter preparation (pad + cast, cached by the caller)
# ---------------------------------------------------------------------------
def prepare_fc_output_model(params):
    """params: list of (w, b) with w shaped (in_dim, out_dim), f32."""
    n_layer = len(params)
    dims = [params[0][0].shape[0]] + [w.shape[1] for (w, _) in params]
    dims_pad = [_round_up(d, LANE) for d in dims]

    flat_wb = []
    for li, (w, b) in enumerate(params):
        dpi, dpo = dims_pad[li], dims_pad[li + 1]
        w_p = jnp.zeros((dpi, dpo), jnp.bfloat16)
        w_p = w_p.at[: w.shape[0], : w.shape[1]].set(w.astype(jnp.bfloat16))
        b_p = jnp.zeros((1, dpo), jnp.float32)
        b_p = b_p.at[0, : b.shape[0]].set(b.astype(jnp.float32))
        flat_wb += [w_p, b_p]

    return dict(
        n_layer=n_layer,
        in_dim=int(dims[0]),
        out_dim=int(dims[-1]),
        dims_pad=tuple(dims_pad),
        flat_wb=tuple(flat_wb),
        apply_logsoftmax=n_layer > 1,   # torch module: 1-layer variant is plain linear
    )


# ---------------------------------------------------------------------------
# Forward: pad x, pick batch tile against the VMEM budget, call the kernel
# ---------------------------------------------------------------------------
def fc_output_model_forward(prepared, x, out_dtype=None):
    n_layer = prepared["n_layer"]
    dims_pad = prepared["dims_pad"]
    flat_wb = prepared["flat_wb"]
    in_dim, out_dim = prepared["in_dim"], prepared["out_dim"]
    apply_ls = prepared["apply_logsoftmax"]
    in_pad, out_pad = dims_pad[0], dims_pad[-1]

    batch = x.shape[0]
    assert x.shape[1] == in_dim, "input feature dim mismatch"
    out_dtype = x.dtype if out_dtype is None else out_dtype
    out_isize = jnp.dtype(out_dtype).itemsize

    # ---- per-generation VMEM budget ----
    vmem_phys = _vmem_capacity_bytes()
    vmem_cap = int(vmem_phys * 0.8)                 # ~51 MiB v7x / ~102 MiB v5e,v6e
    tb_cap = 1024 if vmem_phys > 80 * 2**20 else 512

    # Weights/biases are VMEM-resident (constant index_map, single-buffered).
    resident = sum(int(a.size) * a.dtype.itemsize for a in flat_wb)

    def act_bytes(t):
        # double-buffered bf16 x tile + f32 out tile + hidden-activation scratch
        return 2 * (t * in_pad * 2 + t * out_pad * 4) + 2 * t * max(dims_pad) * 4

    # ---- batch tiling ----
    b16 = _round_up(batch, BATCH_ALIGN)
    tb = min(tb_cap, b16)
    # v7x: make sure there are >=2 grid steps (both TensorCores get work)
    if b16 >= 2 * BATCH_ALIGN and _round_up(b16, tb) // tb < 2:
        tb = _round_up(pl.cdiv(b16, 2), BATCH_ALIGN)
    # shrink activation tiles if the budget is exceeded
    while tb > BATCH_ALIGN and resident + act_bytes(tb) + (2 << 20) > vmem_cap:
        tb = max(BATCH_ALIGN, _round_up(tb // 2, BATCH_ALIGN))
    # TODO(synk): if `resident` alone ever exceeds vmem_cap (very large hidden
    # dims), tile the weights over K/N instead of keeping them VMEM-resident.
    batch_pad = _round_up(b16, tb)
    grid = (batch_pad // tb,)

    # ---- pad x (bf16 from the start: first MXU operand, half the DMA bytes) ----
    x_p = jnp.pad(x.astype(jnp.bfloat16),
                  ((0, batch_pad - batch), (0, in_pad - in_dim)))

    kernel = functools.partial(
        _fused_mlp_kernel, n_layer=n_layer, out_valid=out_dim,
        apply_logsoftmax=apply_ls)

    flops = 2 * batch_pad * sum(dims_pad[i] * dims_pad[i + 1]
                                for i in range(n_layer))
    transcendentals = batch_pad * (out_pad + 1) if apply_ls else 0
    bytes_accessed = (int(x_p.size) * 2 + batch_pad * out_pad * out_isize
                      + resident)
    cost = pl.CostEstimate(flops=flops, transcendentals=transcendentals,
                           bytes_accessed=bytes_accessed)

    def _run(single_buffer_weights):
        wkw = ({"pipeline_mode": pl.Buffered(1)}
               if single_buffer_weights else {})
        in_specs = [pl.BlockSpec((tb, in_pad), lambda i: (i, 0))]
        for li in range(n_layer):
            dpi, dpo = dims_pad[li], dims_pad[li + 1]
            # Constant index_map -> VMEM-resident across batch tiles.
            in_specs.append(pl.BlockSpec((dpi, dpo), lambda i: (0, 0), **wkw))
            in_specs.append(pl.BlockSpec((1, dpo), lambda i: (0, 0), **wkw))
        out_specs = pl.BlockSpec((tb, out_pad), lambda i: (i, 0))

        return pl.pallas_call(
            kernel,
            out_shape=jax.ShapeDtypeStruct((batch_pad, out_pad), out_dtype),
            grid=grid,
            in_specs=in_specs,
            out_specs=out_specs,
            compiler_params=pltpu.CompilerParams(
                dimension_semantics=("parallel",),
                vmem_limit_bytes=vmem_cap),
            cost_estimate=cost,
        )(x_p, *flat_wb)

    try:
        out = _run(True)          # single-buffered resident weights
    except Exception:
        out = _run(False)         # fallback: default double-buffering

    return out[:batch, :out_dim]


def fc_output_model_apply(params, x):
    """Convenience: prepare (pad/cast) + forward in one call."""
    return fc_output_model_forward(prepare_fc_output_model(params), x)


# ---------------------------------------------------------------------------
# Parameter init matching the PyTorch layer shapes (weights stored (in, out))
# ---------------------------------------------------------------------------
def init_fc_output_model(key, n_layer, input_dim, hidden_dim, output_dim,
                         dtype=jnp.float32):
    if n_layer == 1:
        dims = [(input_dim, output_dim)]
    else:
        dims = [(input_dim, hidden_dim)]
        dims += [(hidden_dim, hidden_dim)] * (n_layer - 2)
        dims += [(hidden_dim, int(output_dim))]

    params = []
    for (d_in, d_out) in dims:
        key, kw, kb = jax.random.split(key, 3)
        bound = 1.0 / jnp.sqrt(float(d_in))
        w = jax.random.uniform(kw, (d_in, d_out), dtype, -bound, bound)
        b = jax.random.uniform(kb, (d_out,), dtype, -bound, bound)
        params.append((w, b))
    return params


# ---------------------------------------------------------------------------
# Pure-JAX references
# ---------------------------------------------------------------------------
def fc_output_model_ref(params, x, mxu_bf16=True):
    def mm(a, w):
        if mxu_bf16:
            return jnp.dot(a.astype(jnp.bfloat16), w.astype(jnp.bfloat16),
                           preferred_element_type=jnp.float32)
        return jnp.dot(a, w)

    n_layer = len(params)
    h = x.astype(jnp.float32)
    if n_layer == 1:
        w, b = params[0]
        return mm(h, w) + b
    for layer in range(n_layer - 1):
        w, b = params[layer]
        h = jnp.maximum(mm(h, w) + b, 0.0)
    w, b = params[-1]
    y = mm(h, w) + b
    return jax.nn.log_softmax(y, axis=-1)


if __name__ == "__main__":
    key = jax.random.PRNGKey(0)
    k_param, k_x, k_x2 = jax.random.split(key, 3)

    n_layer, input_dim, hidden_dim, output_dim = 3, 32, 32, 16
    batch = 8

    params = init_fc_output_model(k_param, n_layer, input_dim, hidden_dim,
                                  output_dim)
    prepared = prepare_fc_output_model(params)   # one-time pad/cast (cached)

    x = jax.random.normal(k_x, (batch, input_dim), jnp.float32)
    out = jax.block_until_ready(fc_output_model_forward(prepared, x))
    assert out.shape == (batch, output_dim)

    # tight check against a reference mirroring the bf16-MXU / f32-accum path
    ref_bf16 = fc_output_model_ref(params, x, mxu_bf16=True)
    assert jnp.allclose(out, ref_bf16, atol=1e-4, rtol=1e-4), "mismatch vs bf16 ref"
    # loose check against the full-f32 reference (semantics sanity)
    ref_f32 = fc_output_model_ref(params, x, mxu_bf16=False)
    assert jnp.allclose(out, ref_f32, atol=5e-2, rtol=5e-2), "mismatch vs f32 ref"

    # larger batch: exercises batch tiling with grid >= 2 (v7x dual-TC path)
    x_big = jax.random.normal(k_x2, (300, input_dim), jnp.float32)
    out_big = jax.block_until_ready(fc_output_model_forward(prepared, x_big))
    assert out_big.shape == (300, output_dim)
    assert jnp.allclose(out_big, fc_output_model_ref(params, x_big, mxu_bf16=True),
                        atol=1e-4, rtol=1e-4), "mismatch (big batch) vs bf16 ref"

    # single-layer (plain linear, no log_softmax) code path
    params1 = init_fc_output_model(k_param, 1, input_dim, hidden_dim, output_dim)
    out1 = jax.block_until_ready(fc_output_model_apply(params1, x))
    assert out1.shape == (batch, output_dim)
    assert jnp.allclose(out1, fc_output_model_ref(params1, x, mxu_bf16=True),
                        atol=1e-4, rtol=1e-4), "mismatch (1-layer) vs bf16 ref"

    print("KERNEL_OK")
</pallas_src>

<mosaic_0001>
module attributes {stable_mosaic.version = 11 : i64} {
  func.func @_fused_mlp_kernel(%arg0: i32, %arg1: memref<16x128xbf16, #tpu.memory_space<vmem>>, %arg2: memref<128x128xbf16, #tpu.memory_space<vmem>>, %arg3: memref<1x128xf32, #tpu.memory_space<vmem>>, %arg4: memref<128x128xbf16, #tpu.memory_space<vmem>>, %arg5: memref<1x128xf32, #tpu.memory_space<vmem>>, %arg6: memref<128x128xbf16, #tpu.memory_space<vmem>>, %arg7: memref<1x128xf32, #tpu.memory_space<vmem>>, %arg8: memref<16x128xf32, #tpu.memory_space<vmem>>) attributes {dimension_semantics = [#tpu.dimension_semantics<parallel>], iteration_bounds = array<i64: 1>, scalar_prefetch = 0 : i64, scratch_operands = 0 : i64, tpu.core_type = #tpu.core_type<tc>, window_params = [{transform_indices = @transform_0, window_bounds = array<i64: 16, 128>}, {pipeline_mode = #tpu.pipeline_mode<synchronous>, transform_indices = @transform_1, window_bounds = array<i64: 128, 128>}, {pipeline_mode = #tpu.pipeline_mode<synchronous>, transform_indices = @transform_2, window_bounds = array<i64: 1, 128>}, {pipeline_mode = #tpu.pipeline_mode<synchronous>, transform_indices = @transform_3, window_bounds = array<i64: 128, 128>}, {pipeline_mode = #tpu.pipeline_mode<synchronous>, transform_indices = @transform_4, window_bounds = array<i64: 1, 128>}, {pipeline_mode = #tpu.pipeline_mode<synchronous>, transform_indices = @transform_5, window_bounds = array<i64: 128, 128>}, {pipeline_mode = #tpu.pipeline_mode<synchronous>, transform_indices = @transform_6, window_bounds = array<i64: 1, 128>}, {transform_indices = @transform_7, window_bounds = array<i64: 16, 128>}]} {
    %c0 = arith.constant 0 : index
    %c0_0 = arith.constant 0 : index
    %0 = vector.load %arg1[%c0, %c0_0] : memref<16x128xbf16, #tpu.memory_space<vmem>>, vector<16x128xbf16>
    %c0_1 = arith.constant 0 : index
    %c0_2 = arith.constant 0 : index
    %1 = vector.load %arg2[%c0_1, %c0_2] : memref<128x128xbf16, #tpu.memory_space<vmem>>, vector<128x128xbf16>
    %c0_3 = arith.constant 0 : index
    %c0_4 = arith.constant 0 : index
    %2 = vector.load %arg3[%c0_3, %c0_4] : memref<1x128xf32, #tpu.memory_space<vmem>>, vector<1x128xf32>
    %cst = arith.constant dense<0.000000e+00> : vector<16x128xf32>
    %3 = tpu.matmul %0, %1, %cst {dimension_numbers = #tpu.dot_dimension_numbers<[1], [0], [0], [1], [0, 0, 1, 1], [], []>} : vector<16x128xbf16>, vector<128x128xbf16>, vector<16x128xf32> -> vector<16x128xf32>
    %4 = vector.broadcast %2 : vector<1x128xf32> to vector<16x128xf32>
    %5 = arith.addf %3, %4 : vector<16x128xf32>
    %cst_5 = arith.constant 0.000000e+00 : f32
    %6 = vector.broadcast %cst_5 : f32 to vector<16x128xf32>
    %7 = arith.maximumf %5, %6 : vector<16x128xf32>
    %c0_6 = arith.constant 0 : index
    %c0_7 = arith.constant 0 : index
    %8 = vector.load %arg4[%c0_6, %c0_7] : memref<128x128xbf16, #tpu.memory_space<vmem>>, vector<128x128xbf16>
    %c0_8 = arith.constant 0 : index
    %c0_9 = arith.constant 0 : index
    %9 = vector.load %arg5[%c0_8, %c0_9] : memref<1x128xf32, #tpu.memory_space<vmem>>, vector<1x128xf32>
    %10 = arith.truncf %7 : vector<16x128xf32> to vector<16x128xbf16>
    %cst_10 = arith.constant dense<0.000000e+00> : vector<16x128xf32>
    %11 = tpu.matmul %10, %8, %cst_10 {dimension_numbers = #tpu.dot_dimension_numbers<[1], [0], [0], [1], [0, 0, 1, 1], [], []>} : vector<16x128xbf16>, vector<128x128xbf16>, vector<16x128xf32> -> vector<16x128xf32>
    %12 = vector.broadcast %9 : vector<1x128xf32> to vector<16x128xf32>
    %13 = arith.addf %11, %12 : vector<16x128xf32>
    %cst_11 = arith.constant 0.000000e+00 : f32
    %14 = vector.broadcast %cst_11 : f32 to vector<16x128xf32>
    %15 = arith.maximumf %13, %14 : vector<16x128xf32>
    %c0_12 = arith.constant 0 : index
    %c0_13 = arith.constant 0 : index
    %16 = vector.load %arg6[%c0_12, %c0_13] : memref<128x128xbf16, #tpu.memory_space<vmem>>, vector<128x128xbf16>
    %c0_14 = arith.constant 0 : index
    %c0_15 = arith.constant 0 : index
    %17 = vector.load %arg7[%c0_14, %c0_15] : memref<1x128xf32, #tpu.memory_space<vmem>>, vector<1x128xf32>
    %18 = arith.truncf %15 : vector<16x128xf32> to vector<16x128xbf16>
    %cst_16 = arith.constant dense<0.000000e+00> : vector<16x128xf32>
    %19 = tpu.matmul %18, %16, %cst_16 {dimension_numbers = #tpu.dot_dimension_numbers<[1], [0], [0], [1], [0, 0, 1, 1], [], []>} : vector<16x128xbf16>, vector<128x128xbf16>, vector<16x128xf32> -> vector<16x128xf32>
    %20 = vector.broadcast %17 : vector<1x128xf32> to vector<16x128xf32>
    %21 = arith.addf %19, %20 : vector<16x128xf32>
    %22 = tpu.iota {dimensions = array<i32: 1>} : vector<16x128xi32>
    %c16_i32 = arith.constant 16 : i32
    %23 = vector.broadcast %c16_i32 : i32 to vector<16x128xi32>
    %24 = arith.cmpi slt, %22, %23 : vector<16x128xi32>
    %cst_17 = arith.constant -1.000000e+30 : f32
    %25 = vector.broadcast %cst_17 : f32 to vector<16x128xf32>
    %26 = arith.select %24, %21, %25 : vector<16x128xi1>, vector<16x128xf32>
    %cst_18 = arith.constant dense<0xFF800000> : vector<16xf32>
    %27 = vector.multi_reduction <maximumf>, %26, %cst_18 [1] : vector<16x128xf32> to vector<16xf32>
    %28 = vector.shape_cast %27 : vector<16xf32> to vector<16x1xf32>
    %29 = vector.broadcast %28 : vector<16x1xf32> to vector<16x128xf32>
    %30 = arith.subf %26, %29 : vector<16x128xf32>
    %31 = math.exp %30 : vector<16x128xf32>
    %cst_19 = arith.constant 0.000000e+00 : f32
    %32 = vector.broadcast %cst_19 : f32 to vector<16x128xf32>
    %33 = arith.select %24, %31, %32 : vector<16x128xi1>, vector<16x128xf32>
    %cst_20 = arith.constant dense<0.000000e+00> : vector<16xf32>
    %34 = vector.multi_reduction <add>, %33, %cst_20 [1] : vector<16x128xf32> to vector<16xf32>
    %35 = vector.shape_cast %34 : vector<16xf32> to vector<16x1xf32>
    %36 = math.log %35 : vector<16x1xf32>
    %37 = vector.broadcast %36 : vector<16x1xf32> to vector<16x128xf32>
    %38 = arith.subf %30, %37 : vector<16x128xf32>
    %c0_21 = arith.constant 0 : index
    %c0_22 = arith.constant 0 : index
    %39 = vector.load %arg8[%c0_21, %c0_22] : memref<16x128xf32, #tpu.memory_space<vmem>>, vector<16x128xf32>
    tpu.vector_store %arg8[%c0_21, %c0_22], %38 {strides = array<i32>} : memref<16x128xf32, #tpu.memory_space<vmem>>, vector<16x128xf32>,
    return
  }
  func.func @transform_0(%arg0: i32) -> (i32, i32) {
    %c0_i32 = arith.constant 0 : i32
    %c0_i32_0 = arith.constant 0 : i32
    return %arg0, %c0_i32 : i32, i32
  }
  func.func @transform_1(%arg0: i32) -> (i32, i32) {
    %c0_i32 = arith.constant 0 : i32
    %c0_i32_0 = arith.constant 0 : i32
    %c0_i32_1 = arith.constant 0 : i32
    return %c0_i32, %c0_i32_0 : i32, i32
  }
  func.func @transform_2(%arg0: i32) -> (i32, i32) {
    %c0_i32 = arith.constant 0 : i32
    %c0_i32_0 = arith.constant 0 : i32
    %c0_i32_1 = arith.constant 0 : i32
    return %c0_i32, %c0_i32_0 : i32, i32
  }
  func.func @transform_3(%arg0: i32) -> (i32, i32) {
    %c0_i32 = arith.constant 0 : i32
    %c0_i32_0 = arith.constant 0 : i32
    %c0_i32_1 = arith.constant 0 : i32
    return %c0_i32, %c0_i32_0 : i32, i32
  }
  func.func @transform_4(%arg0: i32) -> (i32, i32) {
    %c0_i32 = arith.constant 0 : i32
    %c0_i32_0 = arith.constant 0 : i32
    %c0_i32_1 = arith.constant 0 : i32
    return %c0_i32, %c0_i32_0 : i32, i32
  }
  func.func @transform_5(%arg0: i32) -> (i32, i32) {
    %c0_i32 = arith.constant 0 : i32
    %c0_i32_0 = arith.constant 0 : i32
    %c0_i32_1 = arith.constant 0 : i32
    return %c0_i32, %c0_i32_0 : i32, i32
  }
  func.func @transform_6(%arg0: i32) -> (i32, i32) {
    %c0_i32 = arith.constant 0 : i32
    %c0_i32_0 = arith.constant 0 : i32
    %c0_i32_1 = arith.constant 0 : i32
    return %c0_i32, %c0_i32_0 : i32, i32
  }
  func.func @transform_7(%arg0: i32) -> (i32, i32) {
    %c0_i32 = arith.constant 0 : i32
    %c0_i32_0 = arith.constant 0 : i32
    return %arg0, %c0_i32 : i32, i32
  }
}

module attributes {stable_mosaic.version = 11 : i64} {
  func.func @_fused_mlp_kernel(%arg0: i32, %arg1: memref<16x128xbf16, #tpu.memory_space<vmem>>, %arg2: memref<128x128xbf16, #tpu.memory_space<vmem>>, %arg3: memref<1x128xf32, #tpu.memory_space<vmem>>, %arg4: memref<128x128xbf16, #tpu.memory_space<vmem>>, %arg5: memref<1x128xf32, #tpu.memory_space<vmem>>, %arg6: memref<128x128xbf16, #tpu.memory_space<vmem>>, %arg7: memref<1x128xf32, #tpu.memory_space<vmem>>, %arg8: memref<16x128xf32, #tpu.memory_space<vmem>>) attributes {dimension_semantics = [#tpu.dimension_semantics<parallel>], iteration_bounds = array<i64: 1>, scalar_prefetch = 0 : i64, scratch_operands = 0 : i64, tpu.core_type = #tpu.core_type<tc>, window_params = [{transform_indices = @transform_0, window_bounds = array<i64: 16, 128>}, {pipeline_mode = #tpu.pipeline_mode<synchronous>, transform_indices = @transform_1, window_bounds = array<i64: 128, 128>}, {pipeline_mode = #tpu.pipeline_mode<synchronous>, transform_indices = @transform_2, window_bounds = array<i64: 1, 128>}, {pipeline_mode = #tpu.pipeline_mode<synchronous>, transform_indices = @transform_3, window_bounds = array<i64: 128, 128>}, {pipeline_mode = #tpu.pipeline_mode<synchronous>, transform_indices = @transform_4, window_bounds = array<i64: 1, 128>}, {pipeline_mode = #tpu.pipeline_mode<synchronous>, transform_indices = @transform_5, window_bounds = array<i64: 128, 128>}, {pipeline_mode = #tpu.pipeline_mode<synchronous>, transform_indices = @transform_6, window_bounds = array<i64: 1, 128>}, {transform_indices = @transform_7, window_bounds = array<i64: 16, 128>}]} {
    %c0 = arith.constant 0 : index
    %c0_0 = arith.constant 0 : index
    %0 = vector.load %arg1[%c0, %c0_0] : memref<16x128xbf16, #tpu.memory_space<vmem>>, vector<16x128xbf16>
    %c0_1 = arith.constant 0 : index
    %c0_2 = arith.constant 0 : index
    %1 = vector.load %arg2[%c0_1, %c0_2] : memref<128x128xbf16, #tpu.memory_space<vmem>>, vector<128x128xbf16>
    %c0_3 = arith.constant 0 : index
    %c0_4 = arith.constant 0 : index
    %2 = vector.load %arg3[%c0_3, %c0_4] : memref<1x128xf32, #tpu.memory_space<vmem>>, vector<1x128xf32>
    %cst = arith.constant dense<0.000000e+00> : vector<16x128xf32>
    %3 = tpu.matmul %0, %1, %cst {dimension_numbers = #tpu.dot_dimension_numbers<[1], [0], [0], [1], [0, 0, 1, 1], [], []>} : vector<16x128xbf16>, vector<128x128xbf16>, vector<16x128xf32> -> vector<16x128xf32>
    %4 = vector.broadcast %2 : vector<1x128xf32> to vector<16x128xf32>
    %5 = arith.addf %3, %4 : vector<16x128xf32>
    %cst_5 = arith.constant 0.000000e+00 : f32
    %6 = vector.broadcast %cst_5 : f32 to vector<16x128xf32>
    %7 = arith.maximumf %5, %6 : vector<16x128xf32>
    %c0_6 = arith.constant 0 : index
    %c0_7 = arith.constant 0 : index
    %8 = vector.load %arg4[%c0_6, %c0_7] : memref<128x128xbf16, #tpu.memory_space<vmem>>, vector<128x128xbf16>
    %c0_8 = arith.constant 0 : index
    %c0_9 = arith.constant 0 : index
    %9 = vector.load %arg5[%c0_8, %c0_9] : memref<1x128xf32, #tpu.memory_space<vmem>>, vector<1x128xf32>
    %10 = arith.truncf %7 : vector<16x128xf32> to vector<16x128xbf16>
    %cst_10 = arith.constant dense<0.000000e+00> : vector<16x128xf32>
    %11 = tpu.matmul %10, %8, %cst_10 {dimension_numbers = #tpu.dot_dimension_numbers<[1], [0], [0], [1], [0, 0, 1, 1], [], []>} : vector<16x128xbf16>, vector<128x128xbf16>, vector<16x128xf32> -> vector<16x128xf32>
    %12 = vector.broadcast %9 : vector<1x128xf32> to vector<16x128xf32>
    %13 = arith.addf %11, %12 : vector<16x128xf32>
    %cst_11 = arith.constant 0.000000e+00 : f32
    %14 = vector.broadcast %cst_11 : f32 to vector<16x128xf32>
    %15 = arith.maximumf %13, %14 : vector<16x128xf32>
    %c0_12 = arith.constant 0 : index
    %c0_13 = arith.constant 0 : index
    %16 = vector.load %arg6[%c0_12, %c0_13] : memref<128x128xbf16, #tpu.memory_space<vmem>>, vector<128x128xbf16>
    %c0_14 = arith.constant 0 : index
    %c0_15 = arith.constant 0 : index
    %17 = vector.load %arg7[%c0_14, %c0_15] : memref<1x128xf32, #tpu.memory_space<vmem>>, vector<1x128xf32>
    %18 = arith.truncf %15 : vector<16x128xf32> to vector<16x128xbf16>
    %cst_16 = arith.constant dense<0.000000e+00> : vector<16x128xf32>
    %19 = tpu.matmul %18, %16, %cst_16 {dimension_numbers = #tpu.dot_dimension_numbers<[1], [0], [0], [1], [0, 0, 1, 1], [], []>} : vector<16x128xbf16>, vector<128x128xbf16>, vector<16x128xf32> -> vector<16x128xf32>
    %20 = vector.broadcast %17 : vector<1x128xf32> to vector<16x128xf32>
    %21 = arith.addf %19, %20 : vector<16x128xf32>
    %22 = tpu.iota {dimensions = array<i32: 1>} : vector<16x128xi32>
    %c16_i32 = arith.constant 16 : i32
    %23 = vector.broadcast %c16_i32 : i32 to vector<16x128xi32>
    %24 = arith.cmpi slt, %22, %23 : vector<16x128xi32>
    %cst_17 = arith.constant -1.000000e+30 : f32
    %25 = vector.broadcast %cst_17 : f32 to vector<16x128xf32>
    %26 = arith.select %24, %21, %25 : vector<16x128xi1>, vector<16x128xf32>
    %cst_18 = arith.constant dense<0xFF800000> : vector<16xf32>
    %27 = vector.multi_reduction <maximumf>, %26, %cst_18 [1] : vector<16x128xf32> to vector<16xf32>
    %28 = vector.shape_cast %27 : vector<16xf32> to vector<16x1xf32>
    %29 = vector.broadcast %28 : vector<16x1xf32> to vector<16x128xf32>
    %30 = arith.subf %26, %29 : vector<16x128xf32>
    %31 = math.exp %30 : vector<16x128xf32>
    %cst_19 = arith.constant 0.000000e+00 : f32
    %32 = vector.broadcast %cst_19 : f32 to vector<16x128xf32>
    %33 = arith.select %24, %31, %32 : vector<16x128xi1>, vector<16x128xf32>
    %cst_20 = arith.constant dense<0.000000e+00> : vector<16xf32>
    %34 = vector.multi_reduction <add>, %33, %cst_20 [1] : vector<16x128xf32> to vector<16xf32>
    %35 = vector.shape_cast %34 : vector<16xf32> to vector<16x1xf32>
    %36 = math.log %35 : vector<16x1xf32>
    %37 = vector.broadcast %36 : vector<16x1xf32> to vector<16x128xf32>
    %38 = arith.subf %30, %37 : vector<16x128xf32>
    %c0_21 = arith.constant 0 : index
    %c0_22 = arith.constant 0 : index
    %39 = vector.load %arg8[%c0_21, %c0_22] : memref<16x128xf32, #tpu.memory_space<vmem>>, vector<16x128xf32>
    tpu.vector_store %arg8[%c0_21, %c0_22], %38 {strides = array<i32>} : memref<16x128xf32, #tpu.memory_space<vmem>>, vector<16x128xf32>,
    return
  }
  func.func @transform_0(%arg0: i32) -> (i32, i32) {
    %c0_i32 = arith.constant 0 : i32
    %c0_i32_0 = arith.constant 0 : i32
    return %arg0, %c0_i32 : i32, i32
  }
  func.func @transform_1(%arg0: i32) -> (i32, i32) {
    %c0_i32 = arith.constant 0 : i32
    %c0_i32_0 = arith.constant 0 : i32
    %c0_i32_1 = arith.constant 0 : i32
    return %c0_i32, %c0_i32_0 : i32, i32
  }
  func.func @transform_2(%arg0: i32) -> (i32, i32) {
    %c0_i32 = arith.constant 0 : i32
    %c0_i32_0 = arith.constant 0 : i32
    %c0_i32_1 = arith.constant 0 : i32
    return %c0_i32, %c0_i32_0 : i32, i32
  }
  func.func @transform_3(%arg0: i32) -> (i32, i32) {
    %c0_i32 = arith.constant 0 : i32
    %c0_i32_0 = arith.constant 0 : i32
    %c0_i32_1 = arith.constant 0 : i32
    return %c0_i32, %c0_i32_0 : i32, i32
  }
  func.func @transform_4(%arg0: i32) -> (i32, i32) {
    %c0_i32 = arith.constant 0 : i32
    %c0_i32_0 = arith.constant 0 : i32
    %c0_i32_1 = arith.constant 0 : i32
    return %c0_i32, %c0_i32_0 : i32, i32
  }
  func.func @transform_5(%arg0: i32) -> (i32, i32) {
    %c0_i32 = arith.constant 0 : i32
    %c0_i32_0 = arith.constant 0 : i32
    %c0_i32_1 = arith.constant 0 : i32
    return %c0_i32, %c0_i32_0 : i32, i32
  }
  func.func @transform_6(%arg0: i32) -> (i32, i32) {
    %c0_i32 = arith.constant 0 : i32
    %c0_i32_0 = arith.constant 0 : i32
    %c0_i32_1 = arith.constant 0 : i32
    return %c0_i32, %c0_i32_0 : i32, i32
  }
  func.func @transform_7(%arg0: i32) -> (i32, i32) {
    %c0_i32 = arith.constant 0 : i32
    %c0_i32_0 = arith.constant 0 : i32
    return %arg0, %c0_i32 : i32, i32
  }
}

</mosaic_0001>

<llo_original>
// kernel: tpu_custom_call.1
$region0: #{tpu_custom_call.1}
  #allocation0 [shape = 'u32[]', space=smem, size = 0x4, offset = 0x4, fixed_abs, tag = 'smem constant byte address 0x4 - core index']
  #allocation1 [shape = 'u32[144,128]{1,0:T(1,128)}', space=vmem, size = 0x12000, scoped, tag = 'internal scratch']
  %s0 = inlined_call_operand.hbm [shape: bf16[16,128], index: 0, kind: input, shape index: {}]
  %s1 = inlined_call_operand.hbm [shape: bf16[128,128], index: 1, kind: input, shape index: {}]
  %s2 = inlined_call_operand.vmem [shape: f32[1,128], index: 2, kind: input, shape index: {}]
  %s3 = inlined_call_operand.hbm [shape: bf16[128,128], index: 3, kind: input, shape index: {}]
  %s4 = inlined_call_operand.vmem [shape: f32[1,128], index: 4, kind: input, shape index: {}]
  %s5 = inlined_call_operand.hbm [shape: bf16[128,128], index: 5, kind: input, shape index: {}]
  %s6 = inlined_call_operand.vmem [shape: f32[1,128], index: 6, kind: input, shape index: {}]
  %s7 = inlined_call_operand.hbm [shape: f32[16,128], index: 7, kind: output, shape index: {}]
  %s8 = sld [smem:[#allocation0]]
  $region54: #{tpu_custom_call.1} parent=0
    _
  %s10 = ssub.s32 1, %s8
  %s11 = scalar_select 0, %s10, %s8
  $region1: #{tpu_custom_call.1} parent=0
    #allocation2 [shape = 'u8[4096]{0}', space=vmem, size = 0x1000, scoped, tag = 'input window, operand 0, single buffered']
    #allocation3 [shape = 's32[1]{0}', space=sflag, size = 0x4, scoped, tag = 'scoped memory for tpu_custom_call.1']
    #allocation4 [shape = 's32[1]{0}', space=sflag, size = 0x4, scoped, tag = 'scoped memory for tpu_custom_call.1']
    #allocation5 [shape = 'u8[32768]{0}', space=vmem, size = 0x8000, scoped, tag = 'input window, operand 1, single buffered']
    #allocation6 [shape = 's32[1]{0}', space=sflag, size = 0x4, scoped, tag = 'scoped memory for tpu_custom_call.1']
    #allocation7 [shape = 'u8[32768]{0}', space=vmem, size = 0x8000, scoped, tag = 'input window, operand 3, single buffered']
    #allocation8 [shape = 'u8[32768]{0}', space=vmem, size = 0x8000, scoped, tag = 'input window, operand 5, single buffered']
    #allocation9 [shape = 's32[1]{0}', space=sflag, size = 0x4, scoped, tag = 'scoped memory for tpu_custom_call.1']
    #allocation10 [shape = 'u8[8192]{0}', space=vmem, size = 0x2000, scoped, tag = 'output window, operand 0, single buffered']
    %12 = vsyncpa [#allocation3], 0
    %13 = vsyncpa [#allocation6], 0
    %14 = vsyncpa [#allocation9], 0
    %15 = vsyncpa [#allocation4], 0
    // Predicated region
    $region2: #{tpu_custom_call.1} parent=1 // pred_check
      _
    $region3: #{tpu_custom_call.1} parent=1 // pred_check_branch
      %17 = sbr.rel (0) target = $region5
    $region4: #{tpu_custom_call.1} parent=1 // pred_region
      %s19 = ssub.s32 128, 128
      %20 = vsyncadd [#allocation3], %s19
      %s21 = sshll.u32 [#allocation2], 4
      %s22 = int_to_ptr.vmem [resolvable:$true] %s21
      %27 = dma.hbm_to_vmem [thread:$0]  %s0, 128, %s22, [#allocation3], 64, 64, 4
    $region5: #{tpu_custom_call.1} parent=1 // pred_fallthru
      _
    // Predicated region
    $region6: #{tpu_custom_call.1} parent=1 // pred_check
      _
    $region7: #{tpu_custom_call.1} parent=1 // pred_check_branch
      %29 = sbr.rel (0) target = $region9
    $region8: #{tpu_custom_call.1} parent=1 // pred_region
      %s31 = ssub.s32 1024, 1024
      %32 = vsyncadd [#allocation6], %s31
      %s33 = sshll.u32 [#allocation5], 4
      %s34 = int_to_ptr.vmem [resolvable:$true] %s33
      %39 = dma.hbm_to_vmem [thread:$0]  %s1, 1024, %s34, [#allocation6], 64, 64, 4
    $region9: #{tpu_custom_call.1} parent=1 // pred_fallthru
      _
    // Predicated region
    $region10: #{tpu_custom_call.1} parent=1 // pred_check
      _
    $region11: #{tpu_custom_call.1} parent=1 // pred_check_branch
      %41 = sbr.rel (0) target = $region13
    $region12: #{tpu_custom_call.1} parent=1 // pred_region
      _
    $region13: #{tpu_custom_call.1} parent=1 // pred_fallthru
      _
    // Predicated region
    $region14: #{tpu_custom_call.1} parent=1 // pred_check
      _
    $region15: #{tpu_custom_call.1} parent=1 // pred_check_branch
      %43 = sbr.rel (0) target = $region17
    $region16: #{tpu_custom_call.1} parent=1 // pred_region
      %s45 = ssub.s32 1024, 1024
      %46 = vsyncadd [#allocation6], %s45
      %s47 = sshll.u32 [#allocation7], 4
      %s48 = int_to_ptr.vmem [resolvable:$true] %s47
      %53 = dma.hbm_to_vmem [thread:$0]  %s3, 1024, %s48, [#allocation6], 64, 64, 4
    $region17: #{tpu_custom_call.1} parent=1 // pred_fallthru
      _
    // Predicated region
    $region18: #{tpu_custom_call.1} parent=1 // pred_check
      _
    $region19: #{tpu_custom_call.1} parent=1 // pred_check_branch
      %55 = sbr.rel (0) target = $region21
    $region20: #{tpu_custom_call.1} parent=1 // pred_region
      _
    $region21: #{tpu_custom_call.1} parent=1 // pred_fallthru
      _
    // Predicated region
    $region22: #{tpu_custom_call.1} parent=1 // pred_check
      _
    $region23: #{tpu_custom_call.1} parent=1 // pred_check_branch
      %57 = sbr.rel (0) target = $region25
    $region24: #{tpu_custom_call.1} parent=1 // pred_region
      %s59 = ssub.s32 1024, 1024
      %60 = vsyncadd [#allocation9], %s59
      %s61 = sshll.u32 [#allocation8], 4
      %s62 = int_to_ptr.vmem [resolvable:$true] %s61
      %67 = dma.hbm_to_vmem [thread:$0]  %s5, 1024, %s62, [#allocation9], 64, 64, 4
    $region25: #{tpu_custom_call.1} parent=1 // pred_fallthru
      _
    // Predicated region
    $region26: #{tpu_custom_call.1} parent=1 // pred_check
      _
    $region27: #{tpu_custom_call.1} parent=1 // pred_check_branch
      %69 = sbr.rel (0) target = $region29
    $region28: #{tpu_custom_call.1} parent=1 // pred_region
      _
    $region29: #{tpu_custom_call.1} parent=1 // pred_fallthru
      _
    // Predicated region
    $region30: #{tpu_custom_call.1} parent=1 // pred_check
      _
    $region31: #{tpu_custom_call.1} parent=1 // pred_check_branch
      %71 = sbr.rel (0) target = $region33
    $region32: #{tpu_custom_call.1} parent=1 // pred_region
      %72 = dma.done [#allocation3], 128
    $region33: #{tpu_custom_call.1} parent=1 // pred_fallthru
      _
    // Predicated region
    $region34: #{tpu_custom_call.1} parent=1 // pred_check
      _
    $region35: #{tpu_custom_call.1} parent=1 // pred_check_branch
      %74 = sbr.rel (0) target = $region37
    $region36: #{tpu_custom_call.1} parent=1 // pred_region
      %75 = dma.done [#allocation6], 1024
    $region37: #{tpu_custom_call.1} parent=1 // pred_fallthru
      _
    // Predicated region
    $region38: #{tpu_custom_call.1} parent=1 // pred_check
      _
    $region39: #{tpu_custom_call.1} parent=1 // pred_check_branch
      %77 = sbr.rel (0) target = $region41
    $region40: #{tpu_custom_call.1} parent=1 // pred_region
      %78 = dma.done [#allocation6], 1024
    $region41: #{tpu_custom_call.1} parent=1 // pred_fallthru
      _
    // Predicated region
    $region42: #{tpu_custom_call.1} parent=1 // pred_check
      _
    $region43: #{tpu_custom_call.1} parent=1 // pred_check_branch
      %80 = sbr.rel (0) target = $region45
    $region44: #{tpu_custom_call.1} parent=1 // pred_region
      %81 = dma.done [#allocation9], 1024
    $region45: #{tpu_custom_call.1} parent=1 // pred_fallthru
      _
    %v83 = vld [vmem:[#allocation2] sm:$0xf]
    %v84 = vld [vmem:[#allocation2 + $0x4] sm:$0xf]
    %v85 = vld [vmem:[#allocation5] sm:$0xf]
    %v86 = vld [vmem:[#allocation5 + $0x4] sm:$0xf]
    %v87 = vld [vmem:[#allocation5 + $0x8] sm:$0xf]
    %v88 = vld [vmem:[#allocation5 + $0xc] sm:$0xf]
    %v89 = vld [vmem:[#allocation5 + $0x10] sm:$0xf]
    %v90 = vld [vmem:[#allocation5 + $0x14] sm:$0xf]
    %v91 = vld [vmem:[#allocation5 + $0x18] sm:$0xf]
    %v92 = vld [vmem:[#allocation5 + $0x1c] sm:$0xf]
    %v93 = vld [vmem:[#allocation5 + $0x20] sm:$0xf]
    %v94 = vld [vmem:[#allocation5 + $0x24] sm:$0xf]
    %v95 = vld [vmem:[#allocation5 + $0x28] sm:$0xf]
    %v96 = vld [vmem:[#allocation5 + $0x2c] sm:$0xf]
    %v97 = vld [vmem:[#allocation5 + $0x30] sm:$0xf]
    %v98 = vld [vmem:[#allocation5 + $0x34] sm:$0xf]
    %v99 = vld [vmem:[#allocation5 + $0x38] sm:$0xf]
    %v100 = vld [vmem:[#allocation5 + $0x3c] sm:$0xf]
    %v101 = vld [vmem:[%s2] sm:$0x1]
    %v103 = vlaneseq
    %v104 = vshrl.u32 %v103, 7
    %v105 = vsub.s32 0, %v104
    %v106 = vrot.slane %v101, %v105
    %v110 = vunpack.c.l.b16 %v83
    %v111 = vunpack.c.l.b16 %v84
    %v112 = vpack.c.b16 %v111, %v110
    %v130 = vunpack.c.l.b16 %v85
    %v131 = vunpack.c.l.b16 %v86
    %v132 = vunpack.c.l.b16 %v87
    %v133 = vunpack.c.l.b16 %v88
    %v134 = vunpack.c.l.b16 %v89
    %v135 = vunpack.c.l.b16 %v90
    %v136 = vunpack.c.l.b16 %v91
    %v137 = vunpack.c.l.b16 %v92
    %v138 = vunpack.c.l.b16 %v93
    %v139 = vunpack.c.l.b16 %v94
    %v140 = vunpack.c.l.b16 %v95
    %v141 = vunpack.c.l.b16 %v96
    %v142 = vunpack.c.l.b16 %v97
    %v143 = vunpack.c.l.b16 %v98
    %v144 = vunpack.c.l.b16 %v99
    %v145 = vunpack.c.l.b16 %v100
    %v146 = vpack.c.b16 %v131, %v130
    %v147 = vpack.c.b16 %v133, %v132
    %v148 = vpack.c.b16 %v135, %v134
    %v149 = vpack.c.b16 %v137, %v136
    %v150 = vpack.c.b16 %v139, %v138
    %v151 = vpack.c.b16 %v141, %v140
    %v152 = vpack.c.b16 %v143, %v142
    %v153 = vpack.c.b16 %v145, %v144
    %162 = vmatprep.subr.bf16.mxu0 0
    %163 = vmatpush1.bf16.msra.mxu0 %v153
    %164 = vmatprep.subr.bf16.mxu0 0
    %165 = vmatpush1.bf16.msra.mxu0 %v152
    %166 = vmatprep.subr.bf16.mxu0 0
    %167 = vmatpush1.bf16.msra.mxu0 %v151
    %168 = vmatprep.subr.bf16.mxu0 0
    %169 = vmatpush1.bf16.msra.mxu0 %v150
    %170 = vmatprep.subr.bf16.mxu0 0
    %171 = vmatpush1.bf16.msra.mxu0 %v149
    %172 = vmatprep.subr.bf16.mxu0 0
    %173 = vmatpush1.bf16.msra.mxu0 %v148
    %174 = vmatprep.subr.bf16.mxu0 0
    %175 = vmatpush1.bf16.msra.mxu0 %v147
    %176 = vmatprep.subr.bf16.mxu0 0
    %177 = vmatpush1.bf16.msra.mxu0 %v146
    %178 = vmatprep.subr.bf16.mxu0 0
    %179 = vmatpush2.bf16.msra.mxu0 0
    %180 = vmatprep.subr.bf16.mxu0 0
    %181 = vmatpush2.bf16.msra.mxu0 0
    %182 = vmatprep.subr.bf16.mxu0 0
    %183 = vmatpush2.bf16.msra.mxu0 0
    %184 = vmatprep.subr.bf16.mxu0 0
    %185 = vmatpush2.bf16.msra.mxu0 0
    %186 = vmatprep.subr.bf16.mxu0 0
    %187 = vmatpush2.bf16.msra.mxu0 0
    %188 = vmatprep.subr.bf16.mxu0 0
    %189 = vmatpush2.bf16.msra.mxu0 0
    %190 = vmatprep.subr.bf16.mxu0 0
    %191 = vmatpush2.bf16.msra.mxu0 0
    %192 = vmatprep.subr.bf16.mxu0 0
    %193 = vmatpush2.bf16.msra.mxu0 0
    %194 = vmatprep.mubr.bf16.mxu0 0
    %195 = vmatmul.mubr.bf16.gmra.mxu0 %v112
    %v196 = vpop.f32.mrf.mxu0
    %v197 = vadd.f32 %v106, %v196
    %v198 = vpop.f32.mrf.mxu0
    %v199 = vpop.f32.mrf.mxu0
    %v200 = vadd.f32 %v106, %v199
    %v201 = vpop.f32.mrf.mxu0
    %202 = vdwg.mxu0
    %v203 = vmax.f32 %v197, 0.0
    %v204 = vmax.f32 %v200, 0.0
    %v205 = vld [vmem:[#allocation7] sm:$0xf]
    %v206 = vld [vmem:[#allocation7 + $0x4] sm:$0xf]
    %v207 = vld [vmem:[#allocation7 + $0x8] sm:$0xf]
    %v208 = vld [vmem:[#allocation7 + $0xc] sm:$0xf]
    %v209 = vld [vmem:[#allocation7 + $0x10] sm:$0xf]
    %v210 = vld [vmem:[#allocation7 + $0x14] sm:$0xf]
    %v211 = vld [vmem:[#allocation7 + $0x18] sm:$0xf]
    %v212 = vld [vmem:[#allocation7 + $0x1c] sm:$0xf]
    %v213 = vld [vmem:[#allocation7 + $0x20] sm:$0xf]
    %v214 = vld [vmem:[#allocation7 + $0x24] sm:$0xf]
    %v215 = vld [vmem:[#allocation7 + $0x28] sm:$0xf]
    %v216 = vld [vmem:[#allocation7 + $0x2c] sm:$0xf]
    %v217 = vld [vmem:[#allocation7 + $0x30] sm:$0xf]
    %v218 = vld [vmem:[#allocation7 + $0x34] sm:$0xf]
    %v219 = vld [vmem:[#allocation7 + $0x38] sm:$0xf]
    %v220 = vld [vmem:[#allocation7 + $0x3c] sm:$0xf]
    %v221 = vld [vmem:[%s4] sm:$0x1]
    %v222 = vpack.c.bf16 %v204, %v203
    %v224 = vlaneseq
    %v225 = vshrl.u32 %v224, 7
    %v226 = vsub.s32 0, %v225
    %v227 = vrot.slane %v221, %v226
    %v245 = vunpack.c.l.b16 %v205
    %v246 = vunpack.c.l.b16 %v206
    %v247 = vunpack.c.l.b16 %v207
    %v248 = vunpack.c.l.b16 %v208
    %v249 = vunpack.c.l.b16 %v209
    %v250 = vunpack.c.l.b16 %v210
    %v251 = vunpack.c.l.b16 %v211
    %v252 = vunpack.c.l.b16 %v212
    %v253 = vunpack.c.l.b16 %v213
    %v254 = vunpack.c.l.b16 %v214
    %v255 = vunpack.c.l.b16 %v215
    %v256 = vunpack.c.l.b16 %v216
    %v257 = vunpack.c.l.b16 %v217
    %v258 = vunpack.c.l.b16 %v218
    %v259 = vunpack.c.l.b16 %v219
    %v260 = vunpack.c.l.b16 %v220
    %v261 = vpack.c.b16 %v246, %v245
    %v262 = vpack.c.b16 %v248, %v247
    %v263 = vpack.c.b16 %v250, %v249
    %v264 = vpack.c.b16 %v252, %v251
    %v265 = vpack.c.b16 %v254, %v253
    %v266 = vpack.c.b16 %v256, %v255
    %v267 = vpack.c.b16 %v258, %v257
    %v268 = vpack.c.b16 %v260, %v259
    %277 = vmatprep.subr.bf16.mxu0 0
    %278 = vmatpush1.bf16.msra.mxu0 %v268
    %279 = vmatprep.subr.bf16.mxu0 0
    %280 = vmatpush1.bf16.msra.mxu0 %v267
    %281 = vmatprep.subr.bf16.mxu0 0
    %282 = vmatpush1.bf16.msra.mxu0 %v266
    %283 = vmatprep.subr.bf16.mxu0 0
    %284 = vmatpush1.bf16.msra.mxu0 %v265
    %285 = vmatprep.subr.bf16.mxu0 0
    %286 = vmatpush1.bf16.msra.mxu0 %v264
    %287 = vmatprep.subr.bf16.mxu0 0
    %288 = vmatpush1.bf16.msra.mxu0 %v263
    %289 = vmatprep.subr.bf16.mxu0 0
    %290 = vmatpush1.bf16.msra.mxu0 %v262
    %291 = vmatprep.subr.bf16.mxu0 0
    %292 = vmatpush1.bf16.msra.mxu0 %v261
    %293 = vmatprep.subr.bf16.mxu0 0
    %294 = vmatpush2.bf16.msra.mxu0 0
    %295 = vmatprep.subr.bf16.mxu0 0
    %296 = vmatpush2.bf16.msra.mxu0 0
    %297 = vmatprep.subr.bf16.mxu0 0
    %298 = vmatpush2.bf16.msra.mxu0 0
    %299 = vmatprep.subr.bf16.mxu0 0
    %300 = vmatpush2.bf16.msra.mxu0 0
    %301 = vmatprep.subr.bf16.mxu0 0
    %302 = vmatpush2.bf16.msra.mxu0 0
    %303 = vmatprep.subr.bf16.mxu0 0
    %304 = vmatpush2.bf16.msra.mxu0 0
    %305 = vmatprep.subr.bf16.mxu0 0
    %306 = vmatpush2.bf16.msra.mxu0 0
    %307 = vmatprep.subr.bf16.mxu0 0
    %308 = vmatpush2.bf16.msra.mxu0 0
    %309 = vmatprep.mubr.bf16.mxu0 0
    %310 = vmatmul.mubr.bf16.gmra.mxu0 %v222
    %v311 = vpop.f32.mrf.mxu0
    %v312 = vadd.f32 %v227, %v311
    %v313 = vpop.f32.mrf.mxu0
    %v314 = vpop.f32.mrf.mxu0
    %v315 = vadd.f32 %v227, %v314
    %v316 = vpop.f32.mrf.mxu0
    %317 = vdwg.mxu0
    %v318 = vmax.f32 %v312, 0.0
    %v319 = vmax.f32 %v315, 0.0
    %v320 = vld [vmem:[#allocation8] sm:$0xf]
    %v321 = vld [vmem:[#allocation8 + $0x4] sm:$0xf]
    %v322 = vld [vmem:[#allocation8 + $0x8] sm:$0xf]
    %v323 = vld [vmem:[#allocation8 + $0xc] sm:$0xf]
    %v324 = vld [vmem:[#allocation8 + $0x10] sm:$0xf]
    %v325 = vld [vmem:[#allocation8 + $0x14] sm:$0xf]
    %v326 = vld [vmem:[#allocation8 + $0x18] sm:$0xf]
    %v327 = vld [vmem:[#allocation8 + $0x1c] sm:$0xf]
    %v328 = vld [vmem:[#allocation8 + $0x20] sm:$0xf]
    %v329 = vld [vmem:[#allocation8 + $0x24] sm:$0xf]
    %v330 = vld [vmem:[#allocation8 + $0x28] sm:$0xf]
    %v331 = vld [vmem:[#allocation8 + $0x2c] sm:$0xf]
    %v332 = vld [vmem:[#allocation8 + $0x30] sm:$0xf]
    %v333 = vld [vmem:[#allocation8 + $0x34] sm:$0xf]
    %v334 = vld [vmem:[#allocation8 + $0x38] sm:$0xf]
    %v335 = vld [vmem:[#allocation8 + $0x3c] sm:$0xf]
    %v336 = vld [vmem:[%s6] sm:$0x1]
    %v337 = vpack.c.bf16 %v319, %v318
    %v339 = vlaneseq
    %v340 = vshrl.u32 %v339, 7
    %v341 = vsub.s32 0, %v340
    %v342 = vrot.slane %v336, %v341
    %v360 = vunpack.c.l.b16 %v320
    %v361 = vunpack.c.l.b16 %v321
    %v362 = vunpack.c.l.b16 %v322
    %v363 = vunpack.c.l.b16 %v323
    %v364 = vunpack.c.l.b16 %v324
    %v365 = vunpack.c.l.b16 %v325
    %v366 = vunpack.c.l.b16 %v326
    %v367 = vunpack.c.l.b16 %v327
    %v368 = vunpack.c.l.b16 %v328
    %v369 = vunpack.c.l.b16 %v329
    %v370 = vunpack.c.l.b16 %v330
    %v371 = vunpack.c.l.b16 %v331
    %v372 = vunpack.c.l.b16 %v332
    %v373 = vunpack.c.l.b16 %v333
    %v374 = vunpack.c.l.b16 %v334
    %v375 = vunpack.c.l.b16 %v335
    %v376 = vpack.c.b16 %v361, %v360
    %v377 = vpack.c.b16 %v363, %v362
    %v378 = vpack.c.b16 %v365, %v364
    %v379 = vpack.c.b16 %v367, %v366
    %v380 = vpack.c.b16 %v369, %v368
    %v381 = vpack.c.b16 %v371, %v370
    %v382 = vpack.c.b16 %v373, %v372
    %v383 = vpack.c.b16 %v375, %v374
    %392 = vmatprep.subr.bf16.mxu0 0
    %393 = vmatpush1.bf16.msra.mxu0 %v383
    %394 = vmatprep.subr.bf16.mxu0 0
    %395 = vmatpush1.bf16.msra.mxu0 %v382
    %396 = vmatprep.subr.bf16.mxu0 0
    %397 = vmatpush1.bf16.msra.mxu0 %v381
    %398 = vmatprep.subr.bf16.mxu0 0
    %399 = vmatpush1.bf16.msra.mxu0 %v380
    %400 = vmatprep.subr.bf16.mxu0 0
    %401 = vmatpush1.bf16.msra.mxu0 %v379
    %402 = vmatprep.subr.bf16.mxu0 0
    %403 = vmatpush1.bf16.msra.mxu0 %v378
    %404 = vmatprep.subr.bf16.mxu0 0
    %405 = vmatpush1.bf16.msra.mxu0 %v377
    %406 = vmatprep.subr.bf16.mxu0 0
    %407 = vmatpush1.bf16.msra.mxu0 %v376
    %408 = vmatprep.subr.bf16.mxu0 0
    %409 = vmatpush2.bf16.msra.mxu0 0
    %410 = vmatprep.subr.bf16.mxu0 0
    %411 = vmatpush2.bf16.msra.mxu0 0
    %412 = vmatprep.subr.bf16.mxu0 0
    %413 = vmatpush2.bf16.msra.mxu0 0
    %414 = vmatprep.subr.bf16.mxu0 0
    %415 = vmatpush2.bf16.msra.mxu0 0
    %416 = vmatprep.subr.bf16.mxu0 0
    %417 = vmatpush2.bf16.msra.mxu0 0
    %418 = vmatprep.subr.bf16.mxu0 0
    %419 = vmatpush2.bf16.msra.mxu0 0
    %420 = vmatprep.subr.bf16.mxu0 0
    %421 = vmatpush2.bf16.msra.mxu0 0
    %422 = vmatprep.subr.bf16.mxu0 0
    %423 = vmatpush2.bf16.msra.mxu0 0
    %424 = vmatprep.mubr.bf16.mxu0 0
    %425 = vmatmul.mubr.bf16.gmra.mxu0 %v337
    %v426 = vpop.f32.mrf.mxu0
    %v427 = vadd.f32 %v342, %v426
    %v428 = vpop.f32.mrf.mxu0
    %v429 = vpop.f32.mrf.mxu0
    %v430 = vadd.f32 %v342, %v429
    %v431 = vpop.f32.mrf.mxu0
    %432 = vdwg.mxu0
    %v433 = vlaneseq
    %v434 = vand.u32 %v433, 127
    %vm435 = vcmp.lt.s32.totalorder %v434, 16
    %v436 = vsel %vm435, %v427, -1e+30
    %v437 = vsel %vm435, %v430, -1e+30
    %438 = vmax.xlane.f32.xlu0 %v436
    %v439 = vpop.xlane.xlu0 %438
    %440 = vmax.xlane.f32.xlu0 %v437
    %v441 = vpop.xlane.xlu0 %440
    %v442 = vsub.f32 %v436, %v439
    %v443 = vsub.f32 %v437, %v441
    %v444 = vmul.f32 %v442, 1.442695
    %v445 = vpow.pop %v444
    %v446 = vmul.f32 %v443, 1.442695
    %v447 = vpow.pop %v446
    %v448 = vsel %vm435, %v445, 0.0
    %v449 = vsel %vm435, %v447, 0.0
    %450 = vadd.xlane.f32.xlu0 %v448
    %v451 = vpop.xlane.xlu0 %450
    %452 = vadd.xlane.f32.xlu0 %v449
    %v453 = vpop.xlane.xlu0 %452
    %v454 = vlog2.pop %v451
    %v455 = vmul.f32 %v454, 0.6931472
    %v456 = vlog2.pop %v453
    %v457 = vmul.f32 %v456, 0.6931472
    %v458 = vsub.f32 %v442, %v455
    %v459 = vsub.f32 %v443, %v457
    %460 = vst [vmem:[#allocation10] sm:$0xff] %v458
    %461 = vst [vmem:[#allocation10 + $0x8] sm:$0xff] %v459
    // Predicated region
    $region46: #{tpu_custom_call.1} parent=1 // pred_check
      _
    $region47: #{tpu_custom_call.1} parent=1 // pred_check_branch
      %463 = sbr.rel (0) target = $region49
    $region48: #{tpu_custom_call.1} parent=1 // pred_region
      %s465 = ssub.s32 256, 256
      %466 = vsyncadd [#allocation4], %s465
      %s467 = sshll.u32 [#allocation10], 4
      %s468 = int_to_ptr.vmem [resolvable:$true] %s467
      %473 = dma.vmem_to_hbm [thread:$0]  %s468, 256, %s7, [#allocation4], 128, 128, 8
    $region49: #{tpu_custom_call.1} parent=1 // pred_fallthru
      _
    // Predicated region
    $region50: #{tpu_custom_call.1} parent=1 // pred_check
      _
    $region51: #{tpu_custom_call.1} parent=1 // pred_check_branch
      %475 = sbr.rel (0) target = $region53
    $region52: #{tpu_custom_call.1} parent=1 // pred_region
      %476 = dma.done [#allocation4], 256
    $region53: #{tpu_custom_call.1} parent=1 // pred_fallthru
      _
    %477 = vsyncpa [#allocation3], 1
    %478 = vsyncpa [#allocation6], 1
    %479 = vsyncpa [#allocation9], 1
    %480 = vsyncpa [#allocation4], 1

// kernel: tpu_custom_call.1
$region0: #{tpu_custom_call.1}
  #allocation0 [shape = 'u32[]', space=smem, size = 0x4, offset = 0x4, fixed_abs, tag = 'smem constant byte address 0x4 - core index']
  #allocation1 [shape = 'u32[144,128]{1,0:T(1,128)}', space=vmem, size = 0x12000, scoped, tag = 'internal scratch']
  %s0 = inlined_call_operand.hbm [shape: bf16[16,128], index: 0, kind: input, shape index: {}]
  %s1 = inlined_call_operand.hbm [shape: bf16[128,128], index: 1, kind: input, shape index: {}]
  %s2 = inlined_call_operand.vmem [shape: f32[1,128], index: 2, kind: input, shape index: {}]
  %s3 = inlined_call_operand.hbm [shape: bf16[128,128], index: 3, kind: input, shape index: {}]
  %s4 = inlined_call_operand.vmem [shape: f32[1,128], index: 4, kind: input, shape index: {}]
  %s5 = inlined_call_operand.hbm [shape: bf16[128,128], index: 5, kind: input, shape index: {}]
  %s6 = inlined_call_operand.vmem [shape: f32[1,128], index: 6, kind: input, shape index: {}]
  %s7 = inlined_call_operand.hbm [shape: f32[16,128], index: 7, kind: output, shape index: {}]
  %s8 = sld [smem:[#allocation0]]
  $region54: #{tpu_custom_call.1} parent=0
    _
  %s10 = ssub.s32 1, %s8
  %s11 = scalar_select 0, %s10, %s8
  $region1: #{tpu_custom_call.1} parent=0
    #allocation2 [shape = 'u8[4096]{0}', space=vmem, size = 0x1000, scoped, tag = 'input window, operand 0, single buffered']
    #allocation3 [shape = 's32[1]{0}', space=sflag, size = 0x4, scoped, tag = 'scoped memory for tpu_custom_call.1']
    #allocation4 [shape = 's32[1]{0}', space=sflag, size = 0x4, scoped, tag = 'scoped memory for tpu_custom_call.1']
    #allocation5 [shape = 'u8[32768]{0}', space=vmem, size = 0x8000, scoped, tag = 'input window, operand 1, single buffered']
    #allocation6 [shape = 's32[1]{0}', space=sflag, size = 0x4, scoped, tag = 'scoped memory for tpu_custom_call.1']
    #allocation7 [shape = 'u8[32768]{0}', space=vmem, size = 0x8000, scoped, tag = 'input window, operand 3, single buffered']
    #allocation8 [shape = 'u8[32768]{0}', space=vmem, size = 0x8000, scoped, tag = 'input window, operand 5, single buffered']
    #allocation9 [shape = 's32[1]{0}', space=sflag, size = 0x4, scoped, tag = 'scoped memory for tpu_custom_call.1']
    #allocation10 [shape = 'u8[8192]{0}', space=vmem, size = 0x2000, scoped, tag = 'output window, operand 0, single buffered']
    %12 = vsyncpa [#allocation3], 0
    %13 = vsyncpa [#allocation6], 0
    %14 = vsyncpa [#allocation9], 0
    %15 = vsyncpa [#allocation4], 0
    // Predicated region
    $region2: #{tpu_custom_call.1} parent=1 // pred_check
      _
    $region3: #{tpu_custom_call.1} parent=1 // pred_check_branch
      %17 = sbr.rel (0) target = $region5
    $region4: #{tpu_custom_call.1} parent=1 // pred_region
      %s19 = ssub.s32 128, 128
      %20 = vsyncadd [#allocation3], %s19
      %s21 = sshll.u32 [#allocation2], 4
      %s22 = int_to_ptr.vmem [resolvable:$true] %s21
      %27 = dma.hbm_to_vmem [thread:$0]  %s0, 128, %s22, [#allocation3], 64, 64, 4
    $region5: #{tpu_custom_call.1} parent=1 // pred_fallthru
      _
    // Predicated region
    $region6: #{tpu_custom_call.1} parent=1 // pred_check
      _
    $region7: #{tpu_custom_call.1} parent=1 // pred_check_branch
      %29 = sbr.rel (0) target = $region9
    $region8: #{tpu_custom_call.1} parent=1 // pred_region
      %s31 = ssub.s32 1024, 1024
      %32 = vsyncadd [#allocation6], %s31
      %s33 = sshll.u32 [#allocation5], 4
      %s34 = int_to_ptr.vmem [resolvable:$true] %s33
      %39 = dma.hbm_to_vmem [thread:$0]  %s1, 1024, %s34, [#allocation6], 64, 64, 4
    $region9: #{tpu_custom_call.1} parent=1 // pred_fallthru
      _
    // Predicated region
    $region10: #{tpu_custom_call.1} parent=1 // pred_check
      _
    $region11: #{tpu_custom_call.1} parent=1 // pred_check_branch
      %41 = sbr.rel (0) target = $region13
    $region12: #{tpu_custom_call.1} parent=1 // pred_region
      _
    $region13: #{tpu_custom_call.1} parent=1 // pred_fallthru
      _
    // Predicated region
    $region14: #{tpu_custom_call.1} parent=1 // pred_check
      _
    $region15: #{tpu_custom_call.1} parent=1 // pred_check_branch
      %43 = sbr.rel (0) target = $region17
    $region16: #{tpu_custom_call.1} parent=1 // pred_region
      %s45 = ssub.s32 1024, 1024
      %46 = vsyncadd [#allocation6], %s45
      %s47 = sshll.u32 [#allocation7], 4
      %s48 = int_to_ptr.vmem [resolvable:$true] %s47
      %53 = dma.hbm_to_vmem [thread:$0]  %s3, 1024, %s48, [#allocation6], 64, 64, 4
    $region17: #{tpu_custom_call.1} parent=1 // pred_fallthru
      _
    // Predicated region
    $region18: #{tpu_custom_call.1} parent=1 // pred_check
      _
    $region19: #{tpu_custom_call.1} parent=1 // pred_check_branch
      %55 = sbr.rel (0) target = $region21
    $region20: #{tpu_custom_call.1} parent=1 // pred_region
      _
    $region21: #{tpu_custom_call.1} parent=1 // pred_fallthru
      _
    // Predicated region
    $region22: #{tpu_custom_call.1} parent=1 // pred_check
      _
    $region23: #{tpu_custom_call.1} parent=1 // pred_check_branch
      %57 = sbr.rel (0) target = $region25
    $region24: #{tpu_custom_call.1} parent=1 // pred_region
      %s59 = ssub.s32 1024, 1024
      %60 = vsyncadd [#allocation9], %s59
      %s61 = sshll.u32 [#allocation8], 4
      %s62 = int_to_ptr.vmem [resolvable:$true] %s61
      %67 = dma.hbm_to_vmem [thread:$0]  %s5, 1024, %s62, [#allocation9], 64, 64, 4
    $region25: #{tpu_custom_call.1} parent=1 // pred_fallthru
      _
    // Predicated region
    $region26: #{tpu_custom_call.1} parent=1 // pred_check
      _
    $region27: #{tpu_custom_call.1} parent=1 // pred_check_branch
      %69 = sbr.rel (0) target = $region29
    $region28: #{tpu_custom_call.1} parent=1 // pred_region
      _
    $region29: #{tpu_custom_call.1} parent=1 // pred_fallthru
      _
    // Predicated region
    $region30: #{tpu_custom_call.1} parent=1 // pred_check
      _
    $region31: #{tpu_custom_call.1} parent=1 // pred_check_branch
      %71 = sbr.rel (0) target = $region33
    $region32: #{tpu_custom_call.1} parent=1 // pred_region
      %72 = dma.done [#allocation3], 128
    $region33: #{tpu_custom_call.1} parent=1 // pred_fallthru
      _
    // Predicated region
    $region34: #{tpu_custom_call.1} parent=1 // pred_check
      _
    $region35: #{tpu_custom_call.1} parent=1 // pred_check_branch
      %74 = sbr.rel (0) target = $region37
    $region36: #{tpu_custom_call.1} parent=1 // pred_region
      %75 = dma.done [#allocation6], 1024
    $region37: #{tpu_custom_call.1} parent=1 // pred_fallthru
      _
    // Predicated region
    $region38: #{tpu_custom_call.1} parent=1 // pred_check
      _
    $region39: #{tpu_custom_call.1} parent=1 // pred_check_branch
      %77 = sbr.rel (0) target = $region41
    $region40: #{tpu_custom_call.1} parent=1 // pred_region
      %78 = dma.done [#allocation6], 1024
    $region41: #{tpu_custom_call.1} parent=1 // pred_fallthru
      _
    // Predicated region
    $region42: #{tpu_custom_call.1} parent=1 // pred_check
      _
    $region43: #{tpu_custom_call.1} parent=1 // pred_check_branch
      %80 = sbr.rel (0) target = $region45
    $region44: #{tpu_custom_call.1} parent=1 // pred_region
      %81 = dma.done [#allocation9], 1024
    $region45: #{tpu_custom_call.1} parent=1 // pred_fallthru
      _
    %v83 = vld [vmem:[#allocation2] sm:$0xf]
    %v84 = vld [vmem:[#allocation2 + $0x4] sm:$0xf]
    %v85 = vld [vmem:[#allocation5] sm:$0xf]
    %v86 = vld [vmem:[#allocation5 + $0x4] sm:$0xf]
    %v87 = vld [vmem:[#allocation5 + $0x8] sm:$0xf]
    %v88 = vld [vmem:[#allocation5 + $0xc] sm:$0xf]
    %v89 = vld [vmem:[#allocation5 + $0x10] sm:$0xf]
    %v90 = vld [vmem:[#allocation5 + $0x14] sm:$0xf]
    %v91 = vld [vmem:[#allocation5 + $0x18] sm:$0xf]
    %v92 = vld [vmem:[#allocation5 + $0x1c] sm:$0xf]
    %v93 = vld [vmem:[#allocation5 + $0x20] sm:$0xf]
    %v94 = vld [vmem:[#allocation5 + $0x24] sm:$0xf]
    %v95 = vld [vmem:[#allocation5 + $0x28] sm:$0xf]
    %v96 = vld [vmem:[#allocation5 + $0x2c] sm:$0xf]
    %v97 = vld [vmem:[#allocation5 + $0x30] sm:$0xf]
    %v98 = vld [vmem:[#allocation5 + $0x34] sm:$0xf]
    %v99 = vld [vmem:[#allocation5 + $0x38] sm:$0xf]
    %v100 = vld [vmem:[#allocation5 + $0x3c] sm:$0xf]
    %v101 = vld [vmem:[%s2] sm:$0x1]
    %v103 = vlaneseq
    %v104 = vshrl.u32 %v103, 7
    %v105 = vsub.s32 0, %v104
    %v106 = vrot.slane %v101, %v105
    %v110 = vunpack.c.l.b16 %v83
    %v111 = vunpack.c.l.b16 %v84
    %v112 = vpack.c.b16 %v111, %v110
    %v130 = vunpack.c.l.b16 %v85
    %v131 = vunpack.c.l.b16 %v86
    %v132 = vunpack.c.l.b16 %v87
    %v133 = vunpack.c.l.b16 %v88
    %v134 = vunpack.c.l.b16 %v89
    %v135 = vunpack.c.l.b16 %v90
    %v136 = vunpack.c.l.b16 %v91
    %v137 = vunpack.c.l.b16 %v92
    %v138 = vunpack.c.l.b16 %v93
    %v139 = vunpack.c.l.b16 %v94
    %v140 = vunpack.c.l.b16 %v95
    %v141 = vunpack.c.l.b16 %v96
    %v142 = vunpack.c.l.b16 %v97
    %v143 = vunpack.c.l.b16 %v98
    %v144 = vunpack.c.l.b16 %v99
    %v145 = vunpack.c.l.b16 %v100
    %v146 = vpack.c.b16 %v131, %v130
    %v147 = vpack.c.b16 %v133, %v132
    %v148 = vpack.c.b16 %v135, %v134
    %v149 = vpack.c.b16 %v137, %v136
    %v150 = vpack.c.b16 %v139, %v138
    %v151 = vpack.c.b16 %v141, %v140
    %v152 = vpack.c.b16 %v143, %v142
    %v153 = vpack.c.b16 %v145, %v144
    %162 = vmatprep.subr.bf16.mxu0 0
    %163 = vmatpush1.bf16.msra.mxu0 %v153
    %164 = vmatprep.subr.bf16.mxu0 0
    %165 = vmatpush1.bf16.msra.mxu0 %v152
    %166 = vmatprep.subr.bf16.mxu0 0
    %167 = vmatpush1.bf16.msra.mxu0 %v151
    %168 = vmatprep.subr.bf16.mxu0 0
    %169 = vmatpush1.bf16.msra.mxu0 %v150
    %170 = vmatprep.subr.bf16.mxu0 0
    %171 = vmatpush1.bf16.msra.mxu0 %v149
    %172 = vmatprep.subr.bf16.mxu0 0
    %173 = vmatpush1.bf16.msra.mxu0 %v148
    %174 = vmatprep.subr.bf16.mxu0 0
    %175 = vmatpush1.bf16.msra.mxu0 %v147
    %176 = vmatprep.subr.bf16.mxu0 0
    %177 = vmatpush1.bf16.msra.mxu0 %v146
    %178 = vmatprep.subr.bf16.mxu0 0
    %179 = vmatpush2.bf16.msra.mxu0 0
    %180 = vmatprep.subr.bf16.mxu0 0
    %181 = vmatpush2.bf16.msra.mxu0 0
    %182 = vmatprep.subr.bf16.mxu0 0
    %183 = vmatpush2.bf16.msra.mxu0 0
    %184 = vmatprep.subr.bf16.mxu0 0
    %185 = vmatpush2.bf16.msra.mxu0 0
    %186 = vmatprep.subr.bf16.mxu0 0
    %187 = vmatpush2.bf16.msra.mxu0 0
    %188 = vmatprep.subr.bf16.mxu0 0
    %189 = vmatpush2.bf16.msra.mxu0 0
    %190 = vmatprep.subr.bf16.mxu0 0
    %191 = vmatpush2.bf16.msra.mxu0 0
    %192 = vmatprep.subr.bf16.mxu0 0
    %193 = vmatpush2.bf16.msra.mxu0 0
    %194 = vmatprep.mubr.bf16.mxu0 0
    %195 = vmatmul.mubr.bf16.gmra.mxu0 %v112
    %v196 = vpop.f32.mrf.mxu0
    %v197 = vadd.f32 %v106, %v196
    %v198 = vpop.f32.mrf.mxu0
    %v199 = vpop.f32.mrf.mxu0
    %v200 = vadd.f32 %v106, %v199
    %v201 = vpop.f32.mrf.mxu0
    %202 = vdwg.mxu0
    %v203 = vmax.f32 %v197, 0.0
    %v204 = vmax.f32 %v200, 0.0
    %v205 = vld [vmem:[#allocation7] sm:$0xf]
    %v206 = vld [vmem:[#allocation7 + $0x4] sm:$0xf]
    %v207 = vld [vmem:[#allocation7 + $0x8] sm:$0xf]
    %v208 = vld [vmem:[#allocation7 + $0xc] sm:$0xf]
    %v209 = vld [vmem:[#allocation7 + $0x10] sm:$0xf]
    %v210 = vld [vmem:[#allocation7 + $0x14] sm:$0xf]
    %v211 = vld [vmem:[#allocation7 + $0x18] sm:$0xf]
    %v212 = vld [vmem:[#allocation7 + $0x1c] sm:$0xf]
    %v213 = vld [vmem:[#allocation7 + $0x20] sm:$0xf]
    %v214 = vld [vmem:[#allocation7 + $0x24] sm:$0xf]
    %v215 = vld [vmem:[#allocation7 + $0x28] sm:$0xf]
    %v216 = vld [vmem:[#allocation7 + $0x2c] sm:$0xf]
    %v217 = vld [vmem:[#allocation7 + $0x30] sm:$0xf]
    %v218 = vld [vmem:[#allocation7 + $0x34] sm:$0xf]
    %v219 = vld [vmem:[#allocation7 + $0x38] sm:$0xf]
    %v220 = vld [vmem:[#allocation7 + $0x3c] sm:$0xf]
    %v221 = vld [vmem:[%s4] sm:$0x1]
    %v222 = vpack.c.bf16 %v204, %v203
    %v224 = vlaneseq
    %v225 = vshrl.u32 %v224, 7
    %v226 = vsub.s32 0, %v225
    %v227 = vrot.slane %v221, %v226
    %v245 = vunpack.c.l.b16 %v205
    %v246 = vunpack.c.l.b16 %v206
    %v247 = vunpack.c.l.b16 %v207
    %v248 = vunpack.c.l.b16 %v208
    %v249 = vunpack.c.l.b16 %v209
    %v250 = vunpack.c.l.b16 %v210
    %v251 = vunpack.c.l.b16 %v211
    %v252 = vunpack.c.l.b16 %v212
    %v253 = vunpack.c.l.b16 %v213
    %v254 = vunpack.c.l.b16 %v214
    %v255 = vunpack.c.l.b16 %v215
    %v256 = vunpack.c.l.b16 %v216
    %v257 = vunpack.c.l.b16 %v217
    %v258 = vunpack.c.l.b16 %v218
    %v259 = vunpack.c.l.b16 %v219
    %v260 = vunpack.c.l.b16 %v220
    %v261 = vpack.c.b16 %v246, %v245
    %v262 = vpack.c.b16 %v248, %v247
    %v263 = vpack.c.b16 %v250, %v249
    %v264 = vpack.c.b16 %v252, %v251
    %v265 = vpack.c.b16 %v254, %v253
    %v266 = vpack.c.b16 %v256, %v255
    %v267 = vpack.c.b16 %v258, %v257
    %v268 = vpack.c.b16 %v260, %v259
    %277 = vmatprep.subr.bf16.mxu0 0
    %278 = vmatpush1.bf16.msra.mxu0 %v268
    %279 = vmatprep.subr.bf16.mxu0 0
    %280 = vmatpush1.bf16.msra.mxu0 %v267
    %281 = vmatprep.subr.bf16.mxu0 0
    %282 = vmatpush1.bf16.msra.mxu0 %v266
    %283 = vmatprep.subr.bf16.mxu0 0
    %284 = vmatpush1.bf16.msra.mxu0 %v265
    %285 = vmatprep.subr.bf16.mxu0 0
    %286 = vmatpush1.bf16.msra.mxu0 %v264
    %287 = vmatprep.subr.bf16.mxu0 0
    %288 = vmatpush1.bf16.msra.mxu0 %v263
    %289 = vmatprep.subr.bf16.mxu0 0
    %290 = vmatpush1.bf16.msra.mxu0 %v262
    %291 = vmatprep.subr.bf16.mxu0 0
    %292 = vmatpush1.bf16.msra.mxu0 %v261
    %293 = vmatprep.subr.bf16.mxu0 0
    %294 = vmatpush2.bf16.msra.mxu0 0
    %295 = vmatprep.subr.bf16.mxu0 0
    %296 = vmatpush2.bf16.msra.mxu0 0
    %297 = vmatprep.subr.bf16.mxu0 0
    %298 = vmatpush2.bf16.msra.mxu0 0
    %299 = vmatprep.subr.bf16.mxu0 0
    %300 = vmatpush2.bf16.msra.mxu0 0
    %301 = vmatprep.subr.bf16.mxu0 0
    %302 = vmatpush2.bf16.msra.mxu0 0
    %303 = vmatprep.subr.bf16.mxu0 0
    %304 = vmatpush2.bf16.msra.mxu0 0
    %305 = vmatprep.subr.bf16.mxu0 0
    %306 = vmatpush2.bf16.msra.mxu0 0
    %307 = vmatprep.subr.bf16.mxu0 0
    %308 = vmatpush2.bf16.msra.mxu0 0
    %309 = vmatprep.mubr.bf16.mxu0 0
    %310 = vmatmul.mubr.bf16.gmra.mxu0 %v222
    %v311 = vpop.f32.mrf.mxu0
    %v312 = vadd.f32 %v227, %v311
    %v313 = vpop.f32.mrf.mxu0
    %v314 = vpop.f32.mrf.mxu0
    %v315 = vadd.f32 %v227, %v314
    %v316 = vpop.f32.mrf.mxu0
    %317 = vdwg.mxu0
    %v318 = vmax.f32 %v312, 0.0
    %v319 = vmax.f32 %v315, 0.0
    %v320 = vld [vmem:[#allocation8] sm:$0xf]
    %v321 = vld [vmem:[#allocation8 + $0x4] sm:$0xf]
    %v322 = vld [vmem:[#allocation8 + $0x8] sm:$0xf]
    %v323 = vld [vmem:[#allocation8 + $0xc] sm:$0xf]
    %v324 = vld [vmem:[#allocation8 + $0x10] sm:$0xf]
    %v325 = vld [vmem:[#allocation8 + $0x14] sm:$0xf]
    %v326 = vld [vmem:[#allocation8 + $0x18] sm:$0xf]
    %v327 = vld [vmem:[#allocation8 + $0x1c] sm:$0xf]
    %v328 = vld [vmem:[#allocation8 + $0x20] sm:$0xf]
    %v329 = vld [vmem:[#allocation8 + $0x24] sm:$0xf]
    %v330 = vld [vmem:[#allocation8 + $0x28] sm:$0xf]
    %v331 = vld [vmem:[#allocation8 + $0x2c] sm:$0xf]
    %v332 = vld [vmem:[#allocation8 + $0x30] sm:$0xf]
    %v333 = vld [vmem:[#allocation8 + $0x34] sm:$0xf]
    %v334 = vld [vmem:[#allocation8 + $0x38] sm:$0xf]
    %v335 = vld [vmem:[#allocation8 + $0x3c] sm:$0xf]
    %v336 = vld [vmem:[%s6] sm:$0x1]
    %v337 = vpack.c.bf16 %v319, %v318
    %v339 = vlaneseq
    %v340 = vshrl.u32 %v339, 7
    %v341 = vsub.s32 0, %v340
    %v342 = vrot.slane %v336, %v341
    %v360 = vunpack.c.l.b16 %v320
    %v361 = vunpack.c.l.b16 %v321
    %v362 = vunpack.c.l.b16 %v322
    %v363 = vunpack.c.l.b16 %v323
    %v364 = vunpack.c.l.b16 %v324
    %v365 = vunpack.c.l.b16 %v325
    %v366 = vunpack.c.l.b16 %v326
    %v367 = vunpack.c.l.b16 %v327
    %v368 = vunpack.c.l.b16 %v328
    %v369 = vunpack.c.l.b16 %v329
    %v370 = vunpack.c.l.b16 %v330
    %v371 = vunpack.c.l.b16 %v331
    %v372 = vunpack.c.l.b16 %v332
    %v373 = vunpack.c.l.b16 %v333
    %v374 = vunpack.c.l.b16 %v334
    %v375 = vunpack.c.l.b16 %v335
    %v376 = vpack.c.b16 %v361, %v360
    %v377 = vpack.c.b16 %v363, %v362
    %v378 = vpack.c.b16 %v365, %v364
    %v379 = vpack.c.b16 %v367, %v366
    %v380 = vpack.c.b16 %v369, %v368
    %v381 = vpack.c.b16 %v371, %v370
    %v382 = vpack.c.b16 %v373, %v372
    %v383 = vpack.c.b16 %v375, %v374
    %392 = vmatprep.subr.bf16.mxu0 0
    %393 = vmatpush1.bf16.msra.mxu0 %v383
    %394 = vmatprep.subr.bf16.mxu0 0
    %395 = vmatpush1.bf16.msra.mxu0 %v382
    %396 = vmatprep.subr.bf16.mxu0 0
    %397 = vmatpush1.bf16.msra.mxu0 %v381
    %398 = vmatprep.subr.bf16.mxu0 0
    %399 = vmatpush1.bf16.msra.mxu0 %v380
    %400 = vmatprep.subr.bf16.mxu0 0
    %401 = vmatpush1.bf16.msra.mxu0 %v379
    %402 = vmatprep.subr.bf16.mxu0 0
    %403 = vmatpush1.bf16.msra.mxu0 %v378
    %404 = vmatprep.subr.bf16.mxu0 0
    %405 = vmatpush1.bf16.msra.mxu0 %v377
    %406 = vmatprep.subr.bf16.mxu0 0
    %407 = vmatpush1.bf16.msra.mxu0 %v376
    %408 = vmatprep.subr.bf16.mxu0 0
    %409 = vmatpush2.bf16.msra.mxu0 0
    %410 = vmatprep.subr.bf16.mxu0 0
    %411 = vmatpush2.bf16.msra.mxu0 0
    %412 = vmatprep.subr.bf16.mxu0 0
    %413 = vmatpush2.bf16.msra.mxu0 0
    %414 = vmatprep.subr.bf16.mxu0 0
    %415 = vmatpush2.bf16.msra.mxu0 0
    %416 = vmatprep.subr.bf16.mxu0 0
    %417 = vmatpush2.bf16.msra.mxu0 0
    %418 = vmatprep.subr.bf16.mxu0 0
    %419 = vmatpush2.bf16.msra.mxu0 0
    %420 = vmatprep.subr.bf16.mxu0 0
    %421 = vmatpush2.bf16.msra.mxu0 0
    %422 = vmatprep.subr.bf16.mxu0 0
    %423 = vmatpush2.bf16.msra.mxu0 0
    %424 = vmatprep.mubr.bf16.mxu0 0
    %425 = vmatmul.mubr.bf16.gmra.mxu0 %v337
    %v426 = vpop.f32.mrf.mxu0
    %v427 = vadd.f32 %v342, %v426
    %v428 = vpop.f32.mrf.mxu0
    %v429 = vpop.f32.mrf.mxu0
    %v430 = vadd.f32 %v342, %v429
    %v431 = vpop.f32.mrf.mxu0
    %432 = vdwg.mxu0
    %v433 = vlaneseq
    %v434 = vand.u32 %v433, 127
    %vm435 = vcmp.lt.s32.totalorder %v434, 16
    %v436 = vsel %vm435, %v427, -1e+30
    %v437 = vsel %vm435, %v430, -1e+30
    %438 = vmax.xlane.f32.xlu0 %v436
    %v439 = vpop.xlane.xlu0 %438
    %440 = vmax.xlane.f32.xlu0 %v437
    %v441 = vpop.xlane.xlu0 %440
    %v442 = vsub.f32 %v436, %v439
    %v443 = vsub.f32 %v437, %v441
    %v444 = vmul.f32 %v442, 1.442695
    %v445 = vpow.pop %v444
    %v446 = vmul.f32 %v443, 1.442695
    %v447 = vpow.pop %v446
    %v448 = vsel %vm435, %v445, 0.0
    %v449 = vsel %vm435, %v447, 0.0
    %450 = vadd.xlane.f32.xlu0 %v448
    %v451 = vpop.xlane.xlu0 %450
    %452 = vadd.xlane.f32.xlu0 %v449
    %v453 = vpop.xlane.xlu0 %452
    %v454 = vlog2.pop %v451
    %v455 = vmul.f32 %v454, 0.6931472
    %v456 = vlog2.pop %v453
    %v457 = vmul.f32 %v456, 0.6931472
    %v458 = vsub.f32 %v442, %v455
    %v459 = vsub.f32 %v443, %v457
    %460 = vst [vmem:[#allocation10] sm:$0xff] %v458
    %461 = vst [vmem:[#allocation10 + $0x8] sm:$0xff] %v459
    // Predicated region
    $region46: #{tpu_custom_call.1} parent=1 // pred_check
      _
    $region47: #{tpu_custom_call.1} parent=1 // pred_check_branch
      %463 = sbr.rel (0) target = $region49
    $region48: #{tpu_custom_call.1} parent=1 // pred_region
      %s465 = ssub.s32 256, 256
      %466 = vsyncadd [#allocation4], %s465
      %s467 = sshll.u32 [#allocation10], 4
      %s468 = int_to_ptr.vmem [resolvable:$true] %s467
      %473 = dma.vmem_to_hbm [thread:$0]  %s468, 256, %s7, [#allocation4], 128, 128, 8
    $region49: #{tpu_custom_call.1} parent=1 // pred_fallthru
      _
    // Predicated region
    $region50: #{tpu_custom_call.1} parent=1 // pred_check
      _
    $region51: #{tpu_custom_call.1} parent=1 // pred_check_branch
      %475 = sbr.rel (0) target = $region53
    $region52: #{tpu_custom_call.1} parent=1 // pred_region
      %476 = dma.done [#allocation4], 256
    $region53: #{tpu_custom_call.1} parent=1 // pred_fallthru
      _
    %477 = vsyncpa [#allocation3], 1
    %478 = vsyncpa [#allocation6], 1
    %479 = vsyncpa [#allocation9], 1
    %480 = vsyncpa [#allocation4], 1

</llo_original>
